<compile_context>
chip_gen: v7x
topology: tpu7x:2x2x1
jax: 0.10.0
libtpu: 0.0.40
codegen_flags: <defaults>
</compile_context>

<pallas_src>
import math

import jax
import jax.numpy as jnp
from jax import lax
from jax.experimental import pallas as pl
from jax.experimental.pallas import tpu as pltpu

# Within the v7x 64 MiB physical VMEM ceiling; generous for v5e/v6e (128 MiB).
_VMEM_LIMIT = 40 * 1024 * 1024


def _round_up(v, m):
    return ((v + m - 1) // m) * m


def _pad2d(x, rows, cols):
    r, c = x.shape
    if (r, c) == (rows, cols):
        return x
    return jnp.pad(x, ((0, rows - r), (0, cols - c)))


# --------------------------------------------------------------------------- #
# Generic tiled NT matmul:  C = A @ B.T (+ bias)     A:(M,K)  B:(N,K)
# --------------------------------------------------------------------------- #

def _nt_dot(a, b):
    # Contract last dims of both operands (NT); f32 accumulation on the MXU.
    return lax.dot_general(a, b, dimension_numbers=(((1,), (1,)), ((), ())),
                           preferred_element_type=jnp.float32)


def _mm_nt_kernel(a_ref, b_ref, o_ref, acc_ref):
    @pl.when(pl.program_id(2) == 0)
    def _init():
        acc_ref[...] = jnp.zeros_like(acc_ref)

    acc_ref[...] += _nt_dot(a_ref[...], b_ref[...])

    @pl.when(pl.program_id(2) == pl.num_programs(2) - 1)
    def _store():
        o_ref[...] = acc_ref[...].astype(o_ref.dtype)


def _mm_nt_bias_kernel(a_ref, b_ref, bias_ref, o_ref, acc_ref):
    @pl.when(pl.program_id(2) == 0)
    def _init():
        acc_ref[...] = jnp.zeros_like(acc_ref)

    acc_ref[...] += _nt_dot(a_ref[...], b_ref[...])

    @pl.when(pl.program_id(2) == pl.num_programs(2) - 1)
    def _store():
        o_ref[...] = (acc_ref[...]
                      + bias_ref[...].astype(jnp.float32)).astype(o_ref.dtype)


# No-scratch fast paths for a single reduction step (K fits in one tile).
def _mm_nt_1k_kernel(a_ref, b_ref, o_ref):
    o_ref[...] = _nt_dot(a_ref[...], b_ref[...]).astype(o_ref.dtype)


def _mm_nt_1k_bias_kernel(a_ref, b_ref, bias_ref, o_ref):
    o_ref[...] = (_nt_dot(a_ref[...], b_ref[...])
                  + bias_ref[...].astype(jnp.float32)).astype(o_ref.dtype)


def matmul_nt(a, b, bias=None, *, out_dtype=None, compute_dtype=jnp.bfloat16,
              tm=512, tn=512, tk=1024):
    """C = A @ B.T (+ bias).  A:(M,K), B:(N,K), bias:(N,)/(1,N) or None."""
    m, k = a.shape
    n, kb = b.shape
    assert k == kb, f"contraction mismatch: {k} vs {kb}"
    out_dtype = a.dtype if out_dtype is None else out_dtype

    # Feed the MXU narrow operands; accumulate f32.
    a = a.astype(compute_dtype)
    b = b.astype(compute_dtype)

    # Small dims use the full extent as the block (always a legal block shape,
    # no (8,128) padding needed).  Large dims use production tiles; padding is
    # only materialized when the dim is actually unaligned (no-op otherwise).
    tm = m if m <= tm else tm
    tn = n if n <= tn else tn
    tk = k if k <= tk else tk
    mp = m if tm == m else _round_up(m, tm)
    np_ = n if tn == n else _round_up(n, tn)
    kp = k if tk == k else _round_up(k, tk)
    a = _pad2d(a, mp, kp)
    b = _pad2d(b, np_, kp)

    gm, gn, gk = mp // tm, np_ // tn, kp // tk
    grid = (gm, gn, gk)

    in_specs = [pl.BlockSpec((tm, tk), lambda i, j, kk: (i, kk)),
                pl.BlockSpec((tn, tk), lambda i, j, kk: (j, kk))]
    operands = [a, b]
    bias_bytes = 0
    if bias is not None:
        bias2 = _pad2d(jnp.asarray(bias, jnp.float32).reshape(1, -1), 1, np_)
        in_specs.append(pl.BlockSpec((1, tn), lambda i, j, kk: (0, j)))
        operands.append(bias2)
        bias_bytes = bias2.size * bias2.dtype.itemsize
        kernel = _mm_nt_bias_kernel if gk > 1 else _mm_nt_1k_bias_kernel
    else:
        kernel = _mm_nt_kernel if gk > 1 else _mm_nt_1k_kernel

    scratch = [pltpu.VMEM((tm, tn), jnp.float32)] if gk > 1 else []

    out_itemsize = jnp.dtype(out_dtype).itemsize
    cost = pl.CostEstimate(
        flops=2 * mp * np_ * kp,
        transcendentals=0,
        bytes_accessed=(a.size * a.dtype.itemsize * gn     # A streamed once per N-tile
                        + b.size * b.dtype.itemsize * gm   # B streamed once per M-tile
                        + bias_bytes
                        + mp * np_ * out_itemsize))

    out = pl.pallas_call(
        kernel,
        out_shape=jax.ShapeDtypeStruct((mp, np_), out_dtype),
        grid_spec=pltpu.PrefetchScalarGridSpec(
            num_scalar_prefetch=0,
            grid=grid,
            in_specs=in_specs,
            out_specs=pl.BlockSpec((tm, tn), lambda i, j, kk: (i, j)),
            scratch_shapes=scratch),
        compiler_params=pltpu.CompilerParams(
            dimension_semantics=("parallel", "parallel", "arbitrary"),
            vmem_limit_bytes=_VMEM_LIMIT),
        cost_estimate=cost,
    )(*operands)

    if (mp, np_) != (m, n):
        out = out[:m, :n]
    return out


# --------------------------------------------------------------------------- #
# Fused sketched forward:  y = (x @ S) @ (W @ S).T (+ b)  in one pallas_call.
# xs = x_tile @ S is built in VMEM scratch at j==0 and reused across N-tiles.
# --------------------------------------------------------------------------- #

def _fused_bias_kernel(x_ref, st_ref, ws_ref, bias_ref, o_ref, xs_ref):
    @pl.when(pl.program_id(1) == 0)
    def _build_xs():
        xs_ref[...] = _nt_dot(x_ref[...], st_ref[...])           # (tm, ks) f32

    y = _nt_dot(xs_ref[...].astype(ws_ref.dtype), ws_ref[...])   # (tm, tn) f32
    o_ref[...] = (y + bias_ref[...].astype(jnp.float32)).astype(o_ref.dtype)


def _fused_kernel(x_ref, st_ref, ws_ref, o_ref, xs_ref):
    @pl.when(pl.program_id(1) == 0)
    def _build_xs():
        xs_ref[...] = _nt_dot(x_ref[...], st_ref[...])

    o_ref[...] = _nt_dot(xs_ref[...].astype(ws_ref.dtype),
                         ws_ref[...]).astype(o_ref.dtype)


def _fused_fits_vmem(tm, tn, k, ks, out_itemsize, cd_itemsize=2,
                     budget=24 * 1024 * 1024):
    b = 2 * tm * k * cd_itemsize      # x block (double-buffered)
    b += 2 * ks * k * cd_itemsize     # S_t block
    b += 2 * tn * ks * cd_itemsize    # WS block
    b += 2 * tm * tn * out_itemsize   # output block
    b += tm * ks * 4                  # xs scratch (f32)
    return b <= budget


def sketched_forward_fused(x2, sketch_t, sketched_weight, bias, *, out_dtype,
                           tm=512, tn=512):
    m, k = x2.shape
    ks = sketch_t.shape[0]
    n = sketched_weight.shape[0]
    cd = sketch_t.dtype

    tm = m if m <= tm else tm
    tn = n if n <= tn else tn
    mp = m if tm == m else _round_up(m, tm)
    np_ = n if tn == n else _round_up(n, tn)

    x_p = _pad2d(x2.astype(cd), mp, k)
    ws_p = _pad2d(sketched_weight.astype(cd), np_, ks)

    grid = (mp // tm, np_ // tn)
    in_specs = [pl.BlockSpec((tm, k), lambda i, j: (i, 0)),
                pl.BlockSpec((ks, k), lambda i, j: (0, 0)),
                pl.BlockSpec((tn, ks), lambda i, j: (j, 0))]
    operands = [x_p, sketch_t, ws_p]
    if bias is not None:
        bias2 = _pad2d(jnp.asarray(bias, jnp.float32).reshape(1, -1), 1, np_)
        in_specs.append(pl.BlockSpec((1, tn), lambda i, j: (0, j)))
        operands.append(bias2)
        kernel = _fused_bias_kernel
    else:
        kernel = _fused_kernel

    out_itemsize = jnp.dtype(out_dtype).itemsize
    cost = pl.CostEstimate(
        flops=2 * mp * k * ks + 2 * mp * np_ * ks,
        transcendentals=0,
        bytes_accessed=(x_p.size * x_p.dtype.itemsize
                        + sketch_t.size * sketch_t.dtype.itemsize
                        + ws_p.size * ws_p.dtype.itemsize * (mp // tm)
                        + mp * np_ * out_itemsize))

    out = pl.pallas_call(
        kernel,
        out_shape=jax.ShapeDtypeStruct((mp, np_), out_dtype),
        grid_spec=pltpu.PrefetchScalarGridSpec(
            num_scalar_prefetch=0,
            grid=grid,
            in_specs=in_specs,
            out_specs=pl.BlockSpec((tm, tn), lambda i, j: (i, j)),
            scratch_shapes=[pltpu.VMEM((tm, ks), jnp.float32)]),
        compiler_params=pltpu.CompilerParams(
            # i parallel (megacore-shardable), j arbitrary: xs scratch is
            # rebuilt at j==0 for every i each core owns, so sharding i is safe.
            dimension_semantics=("parallel", "arbitrary"),
            vmem_limit_bytes=_VMEM_LIMIT),
        cost_estimate=cost,
    )(*operands)

    if (mp, np_) != (m, n):
        out = out[:m, :n]
    return out


# --------------------------------------------------------------------------- #
# RLALinear: sketch generation, one-time param prep, forward
# --------------------------------------------------------------------------- #

def make_sketch(key, in_features, sketch_size, mode="rademacher",
                dtype=jnp.float32):
    """Sketch in transposed layout S_t = S.T, shape (sketch_size, in_features)."""
    scale = 1.0 / math.sqrt(sketch_size)
    shape = (sketch_size, in_features)
    if mode == "rademacher":
        # TODO(synk): on v5e/v6e an int8 ±1 sketch (scale folded into WS) would run
        # the x@S matmul on the int8 MXU path; kept bf16 here for v7x portability.
        signs = jax.random.rademacher(key, shape, dtype=jnp.int32)
        return signs.astype(dtype) * jnp.asarray(scale, dtype)
    if mode == "gaussian":
        return jax.random.normal(key, shape, dtype=dtype) * jnp.asarray(scale, dtype)
    raise ValueError(f"unknown sketch_mode {mode!r}")


def prepare_rla_linear(weight, bias=None, sketch_t=None,
                       compute_dtype=jnp.bfloat16):
    """One-time prep of the static operands: cast weights/sketch to the MXU
    compute dtype and hoist the x-independent WS = W @ S out of the forward."""
    params = {
        "weight": weight.astype(compute_dtype),
        "bias": None if bias is None else jnp.asarray(bias, jnp.float32).reshape(1, -1),
        "out_features": weight.shape[0],
        "in_features": weight.shape[1],
    }
    if sketch_t is not None:
        params["sketch_t"] = sketch_t.astype(compute_dtype)
        ws = matmul_nt(weight, sketch_t, out_dtype=jnp.float32,
                       compute_dtype=compute_dtype)          # (out, sketch)
        params["sketched_weight"] = ws.astype(compute_dtype)
    return params


def rla_linear_forward(x, params, *, deterministic):
    """Pallas forward of RLALinear.  x: (..., in_features)."""
    in_features = params["in_features"]
    out_features = params["out_features"]
    lead = x.shape[:-1]
    x2 = x.reshape(-1, in_features)
    out_dtype = x.dtype

    if deterministic:
        out = matmul_nt(x2, params["weight"], params["bias"], out_dtype=out_dtype)
    else:
        st = params["sketch_t"]
        ws = params["sketched_weight"]
        ks = st.shape[0]
        tm = min(x2.shape[0], 512)
        tn = min(out_features, 512)
        if _fused_fits_vmem(tm, tn, in_features, ks, jnp.dtype(out_dtype).itemsize):
            out = sketched_forward_fused(x2, st, ws, params["bias"],
                                         out_dtype=out_dtype, tm=tm, tn=tn)
        else:
            # Fallback for very large in_features: two NT matmuls (xs hits HBM).
            xs = matmul_nt(x2, st, out_dtype=jnp.bfloat16)
            out = matmul_nt(xs, ws, params["bias"], out_dtype=out_dtype)

    return out.reshape(*lead, out_features)


def init_rla_linear_params(key, in_features, out_features, dtype=jnp.float32):
    # Matches nn.Linear reset_parameters:
    # kaiming_uniform(a=sqrt(5)) -> U(-1/sqrt(fan_in), 1/sqrt(fan_in)).
    kw, kb = jax.random.split(key)
    bound = 1.0 / math.sqrt(in_features)
    weight = jax.random.uniform(kw, (out_features, in_features), dtype,
                                minval=-bound, maxval=bound)
    bias = jax.random.uniform(kb, (out_features,), dtype,
                              minval=-bound, maxval=bound)
    return weight, bias


# --------------------------------------------------------------------------- #
# Main
# --------------------------------------------------------------------------- #

if __name__ == "__main__":
    batch, seq = 2, 8
    in_features, out_features = 32, 16
    sketch_size = 8
    dtype = jnp.float32

    key = jax.random.PRNGKey(0)
    k_x, k_p, k_s = jax.random.split(key, 3)

    x = jax.random.normal(k_x, (batch, seq, in_features), dtype)
    weight, bias = init_rla_linear_params(k_p, in_features, out_features, dtype)
    # TODO(synk): PyTorch draws a fresh sketch inside every forward via torch RNG;
    # here the sketch is drawn once in the wrapper and reused across calls.
    sketch_t = make_sketch(k_s, in_features, sketch_size,
                           mode="rademacher", dtype=dtype)

    params = prepare_rla_linear(weight, bias, sketch_t)

    # deterministic=True: exact linear
    y_det = jax.block_until_ready(rla_linear_forward(x, params, deterministic=True))
    # deterministic=False: randomized (projection sketch) linear, fused kernel
    y_rnd = jax.block_until_ready(rla_linear_forward(x, params, deterministic=False))

    # References with the same bf16-operand / f32-accumulation math the kernels use.
    bf = jnp.bfloat16
    x2 = x.reshape(-1, in_features)
    xb, wb, sb = x2.astype(bf), weight.astype(bf), sketch_t.astype(bf)
    b32 = bias.astype(jnp.float32)
    ref_det = (jnp.dot(xb, wb.T, preferred_element_type=jnp.float32) + b32
               ).reshape(batch, seq, out_features)
    ws_ref = jnp.dot(wb, sb.T, preferred_element_type=jnp.float32).astype(bf)
    xs_ref = jnp.dot(xb, sb.T, preferred_element_type=jnp.float32).astype(bf)
    ref_rnd = (jnp.dot(xs_ref, ws_ref.T, preferred_element_type=jnp.float32) + b32
               ).reshape(batch, seq, out_features)

    # Semantics sanity against full-precision math (loose tolerance, bf16 MXU).
    ref_det_f32 = (x2 @ weight.T + bias).reshape(batch, seq, out_features)

    assert y_det.shape == (batch, seq, out_features)
    assert y_rnd.shape == (batch, seq, out_features)
    assert jnp.allclose(y_det, ref_det, atol=2e-2, rtol=2e-2), "deterministic mismatch"
    assert jnp.allclose(y_rnd, ref_rnd, atol=2e-2, rtol=2e-2), "sketched mismatch"
    assert jnp.allclose(y_det, ref_det_f32, atol=1e-1, rtol=1e-1), "f32 sanity mismatch"

    print("KERNEL_OK")
</pallas_src>

<mosaic_0001>
module attributes {stable_mosaic.version = 11 : i64} {
  func.func @_mm_nt_1k_kernel(%arg0: i32, %arg1: i32, %arg2: i32, %arg3: memref<16x32xbf16, #tpu.memory_space<vmem>>, %arg4: memref<8x32xbf16, #tpu.memory_space<vmem>>, %arg5: memref<16x8xf32, #tpu.memory_space<vmem>>) attributes {dimension_semantics = [#tpu.dimension_semantics<parallel>, #tpu.dimension_semantics<parallel>, #tpu.dimension_semantics<arbitrary>], iteration_bounds = array<i64: 1, 1, 1>, scalar_prefetch = 0 : i64, scratch_operands = 0 : i64, tpu.core_type = #tpu.core_type<tc>, window_params = [{transform_indices = @transform_0, window_bounds = array<i64: 16, 32>}, {transform_indices = @transform_1, window_bounds = array<i64: 8, 32>}, {transform_indices = @transform_2, window_bounds = array<i64: 16, 8>}]} {
    %c0 = arith.constant 0 : index
    %c0_0 = arith.constant 0 : index
    %0 = vector.load %arg3[%c0, %c0_0] : memref<16x32xbf16, #tpu.memory_space<vmem>>, vector<16x32xbf16>
    %c0_1 = arith.constant 0 : index
    %c0_2 = arith.constant 0 : index
    %1 = vector.load %arg4[%c0_1, %c0_2] : memref<8x32xbf16, #tpu.memory_space<vmem>>, vector<8x32xbf16>
    %cst = arith.constant dense<0.000000e+00> : vector<16x8xf32>
    %2 = tpu.matmul %0, %1, %cst {dimension_numbers = #tpu.dot_dimension_numbers<[1], [1], [0], [0], [0, 0, 1, 0], [], []>} : vector<16x32xbf16>, vector<8x32xbf16>, vector<16x8xf32> -> vector<16x8xf32>
    %c0_3 = arith.constant 0 : index
    %c0_4 = arith.constant 0 : index
    %3 = vector.load %arg5[%c0_3, %c0_4] : memref<16x8xf32, #tpu.memory_space<vmem>>, vector<16x8xf32>
    tpu.vector_store %arg5[%c0_3, %c0_4], %2 {strides = array<i32>} : memref<16x8xf32, #tpu.memory_space<vmem>>, vector<16x8xf32>,
    return
  }
  func.func @transform_0(%arg0: i32, %arg1: i32, %arg2: i32) -> (i32, i32) {
    %c0_i32 = arith.constant 0 : i32
    return %arg0, %arg2 : i32, i32
  }
  func.func @transform_1(%arg0: i32, %arg1: i32, %arg2: i32) -> (i32, i32) {
    %c0_i32 = arith.constant 0 : i32
    return %arg1, %arg2 : i32, i32
  }
  func.func @transform_2(%arg0: i32, %arg1: i32, %arg2: i32) -> (i32, i32) {
    %c0_i32 = arith.constant 0 : i32
    return %arg0, %arg1 : i32, i32
  }
}

</mosaic_0001>

<llo_original>
// kernel: tpu_custom_call.1
$region0: #{tpu_custom_call.1}
  #allocation0 [shape = 'u32[]', space=smem, size = 0x4, offset = 0x4, fixed_abs, tag = 'smem constant byte address 0x4 - core index']
  #allocation1 [shape = 'u32[144,128]{1,0:T(1,128)}', space=vmem, size = 0x12000, scoped, tag = 'internal scratch']
  %s0 = inlined_call_operand.hbm [shape: bf16[16,32], index: 0, kind: input, shape index: {}]
  %s1 = inlined_call_operand.hbm [shape: bf16[8,32], index: 1, kind: input, shape index: {}]
  %s2 = inlined_call_operand.vmem [shape: f32[16,8], index: 2, kind: output, shape index: {}]
  %s3 = sld [smem:[#allocation0]]
  $region26: #{tpu_custom_call.1} parent=0
    _
  %s5 = ssub.s32 1, %s3
  %s6 = scalar_select 0, %s5, %s3
  $region1: #{tpu_custom_call.1} parent=0
    #allocation2 [shape = 'u8[4096]{0}', space=vmem, size = 0x1000, scoped, tag = 'input window, operand 0, single buffered']
    #allocation3 [shape = 's32[1]{0}', space=sflag, size = 0x4, scoped, tag = 'scoped memory for tpu_custom_call.1']
    #allocation4 [shape = 'u8[2048]{0}', space=vmem, size = 0x800, scoped, tag = 'input window, operand 1, single buffered']
    #allocation5 [shape = 's32[1]{0}', space=sflag, size = 0x4, scoped, tag = 'scoped memory for tpu_custom_call.1']
    %7 = vsyncpa [#allocation3], 0
    %8 = vsyncpa [#allocation5], 0
    // Predicated region
    $region2: #{tpu_custom_call.1} parent=1 // pred_check
      _
    $region3: #{tpu_custom_call.1} parent=1 // pred_check_branch
      %10 = sbr.rel (0) target = $region5
    $region4: #{tpu_custom_call.1} parent=1 // pred_region
      %s12 = ssub.s32 128, 128
      %13 = vsyncadd [#allocation3], %s12
      %s14 = sshll.u32 [#allocation2], 4
      %s15 = int_to_ptr.vmem [resolvable:$true] %s14
      %20 = dma.hbm_to_vmem [thread:$0]  %s0, 128, %s15, [#allocation3], 64, 64, 4
    $region5: #{tpu_custom_call.1} parent=1 // pred_fallthru
      _
    // Predicated region
    $region6: #{tpu_custom_call.1} parent=1 // pred_check
      _
    $region7: #{tpu_custom_call.1} parent=1 // pred_check_branch
      %22 = sbr.rel (0) target = $region9
    $region8: #{tpu_custom_call.1} parent=1 // pred_region
      %s24 = ssub.s32 64, 64
      %25 = vsyncadd [#allocation5], %s24
      %s27 = sshll.u32 [#allocation4], 4
      %s28 = int_to_ptr.vmem [resolvable:$true] %s27
      %30 = dma.hbm_to_vmem [thread:$0]  %s1, 64, %s28, [#allocation5]
    $region9: #{tpu_custom_call.1} parent=1 // pred_fallthru
      _
    // Predicated region
    $region10: #{tpu_custom_call.1} parent=1 // pred_check
      _
    $region11: #{tpu_custom_call.1} parent=1 // pred_check_branch
      %32 = sbr.rel (0) target = $region13
    $region12: #{tpu_custom_call.1} parent=1 // pred_region
      %33 = dma.done [#allocation3], 128
    $region13: #{tpu_custom_call.1} parent=1 // pred_fallthru
      _
    // Predicated region
    $region14: #{tpu_custom_call.1} parent=1 // pred_check
      _
    $region15: #{tpu_custom_call.1} parent=1 // pred_check_branch
      %35 = sbr.rel (0) target = $region17
    $region16: #{tpu_custom_call.1} parent=1 // pred_region
      %36 = dma.done [#allocation5], 64
    $region17: #{tpu_custom_call.1} parent=1 // pred_fallthru
      _
    %v38 = vld [vmem:[#allocation2] sm:$0xf]
    %v39 = vld [vmem:[#allocation2 + $0x4] sm:$0xf]
    %v40 = vld [vmem:[#allocation4] sm:$0xf]
    %v43 = vunpack.c.l.b16 %v38
    %v44 = vunpack.c.l.b16 %v39
    %v45 = vpack.c.b16 %v44, %v43
    %vm46 = vcmask 261120
    %v48 = vsel %vm46, %v45, 0
    %v51 = vsel %vm46, %v40, 0
    %53 = vmatprep.subr.bf16.mxu0 0
    %54 = vmatpush1.bf16.xpose.msra.mxu0 %v51
    %55 = vmatprep.subr.bf16.mxu0 0
    %56 = vmatpush1.bf16.xpose.msra.mxu0 0
    %57 = vmatprep.subr.bf16.mxu0 0
    %58 = vmatpush1.bf16.xpose.msra.mxu0 0
    %59 = vmatprep.subr.bf16.mxu0 0
    %60 = vmatpush1.bf16.xpose.msra.mxu0 0
    %61 = vmatprep.subr.bf16.mxu0 0
    %62 = vmatpush1.bf16.xpose.msra.mxu0 0
    %63 = vmatprep.subr.bf16.mxu0 0
    %64 = vmatpush1.bf16.xpose.msra.mxu0 0
    %65 = vmatprep.subr.bf16.mxu0 0
    %66 = vmatpush1.bf16.xpose.msra.mxu0 0
    %67 = vmatprep.subr.bf16.mxu0 0
    %68 = vmatpush1.bf16.xpose.msra.mxu0 0
    %69 = vmatprep.subr.bf16.mxu0 0
    %70 = vmatpush1.bf16.xpose.msra.mxu0 0
    %71 = vmatprep.subr.bf16.mxu0 0
    %72 = vmatpush1.bf16.xpose.msra.mxu0 0
    %73 = vmatprep.subr.bf16.mxu0 0
    %74 = vmatpush1.bf16.xpose.msra.mxu0 0
    %75 = vmatprep.subr.bf16.mxu0 0
    %76 = vmatpush1.bf16.xpose.msra.mxu0 0
    %77 = vmatprep.subr.bf16.mxu0 0
    %78 = vmatpush1.bf16.xpose.msra.mxu0 0
    %79 = vmatprep.subr.bf16.mxu0 0
    %80 = vmatpush1.bf16.xpose.msra.mxu0 0
    %81 = vmatprep.subr.bf16.mxu0 0
    %82 = vmatpush1.bf16.xpose.msra.mxu0 0
    %83 = vmatprep.subr.bf16.mxu0 0
    %84 = vmatpush1.bf16.xpose.msra.mxu0 0
    %85 = vmatprep.mubr.bf16.mxu0 0
    %86 = vmatmul.mubr.bf16.gmra.mrb[0].mxu0 %v48
    %v87 = vpop.f32.mrb[0].mxu0
    %v88 = vadd.f32 0.0, %v87
    %v89 = vpop.f32.mrb[0].mxu0
    %v90 = vpop.f32.mrb[0].mxu0
    %v91 = vadd.f32 0.0, %v90
    %v92 = vpop.f32.mrb[0].mxu0
    %93 = vdwg.mxu0
    %vm94 = vcmask 64512
    %95 = vst.msk [vmem:[%s2] sm:$0xff] %vm94, %v88
    %96 = vst.msk [vmem:[%s2 + $0x8] sm:$0xff] %vm94, %v91
    // Predicated region
    $region18: #{tpu_custom_call.1} parent=1 // pred_check
      _
    $region19: #{tpu_custom_call.1} parent=1 // pred_check_branch
      %98 = sbr.rel (0) target = $region21
    $region20: #{tpu_custom_call.1} parent=1 // pred_region
      _
    $region21: #{tpu_custom_call.1} parent=1 // pred_fallthru
      _
    // Predicated region
    $region22: #{tpu_custom_call.1} parent=1 // pred_check
      _
    $region23: #{tpu_custom_call.1} parent=1 // pred_check_branch
      %100 = sbr.rel (0) target = $region25
    $region24: #{tpu_custom_call.1} parent=1 // pred_region
      _
    $region25: #{tpu_custom_call.1} parent=1 // pred_fallthru
      _
    %101 = vsyncpa [#allocation3], 1
    %102 = vsyncpa [#allocation5], 1

</llo_original>
